<compile_context>
chip_gen: v7x
topology: tpu7x:2x2x1
jax: 0.10.0
libtpu: 0.0.40
codegen_flags: <defaults>
</compile_context>

<pallas_src>
import jax
import jax.numpy as jnp
from jax.experimental import pallas as pl
from jax.experimental.pallas import tpu as pltpu


def _copy_kernel(in_ref, out_ref):
    # Straight lane-dense tile copy; the wrapper-side reshape did the "rearrange".
    out_ref[...] = in_ref[...]


def _largest_divisor_at_most(n: int, cap: int, multiple_of: int = 1):
    """Largest divisor d of n with d <= cap and d % multiple_of == 0 (else None)."""
    cap = min(cap, n)
    best = None
    d = 1
    while d * d <= n:
        if n % d == 0:
            for cand in (d, n // d):
                if cand <= cap and cand % multiple_of == 0:
                    if best is None or cand > best:
                        best = cand
        d += 1
    return best


def batch_to_shared_objects_reference(x: jax.Array, num_objects: int) -> jax.Array:
    """Actually-optimal path: metadata-only reshape (zero data movement)."""
    bo, c, h, w = x.shape
    b = bo // num_objects
    return x.reshape(b, num_objects * c, h, w)


def batch_to_shared_objects(
    x: jax.Array, num_objects: int, *, target_block_bytes: int = 4 << 20
) -> jax.Array:
    """Pallas implementation of rearrange('(b o) c h w -> b (o c) h w')."""
    bo, c, h, w = x.shape
    assert bo % num_objects == 0, "leading dim must be divisible by num_objects"
    b = bo // num_objects
    o = num_objects

    total = bo * c * h * w
    itemsize = jnp.dtype(x.dtype).itemsize

    # --- Pick a lane-dense 2-D view (R, C) and a legal fat block (Rb, Cb) -----
    if total % 128 == 0:
        # Lane dim: largest multiple-of-128 divisor such that an 8-row block
        # still fits the byte budget (so Rb=8 is always admissible).
        col_cap = max(128, target_block_bytes // (8 * itemsize))
        C = _largest_divisor_at_most(total, col_cap, 128)  # >= 128 by construction
        R = total // C
        Cb = C  # last dim == full array dim -> always legal, fully lane-dense
        if R <= 8:
            Rb = R  # second-last dim == full array dim -> legal
        else:
            row_cap = max(1, target_block_bytes // (C * itemsize))
            Rb = _largest_divisor_at_most(R, row_cap, 8)  # (8,·)-aligned block
            if Rb is None:
                if R * C * itemsize <= 2 * target_block_bytes:
                    Rb = R  # full rows: legal, at most 2x the byte budget
                else:
                    # Rare pathological shape: accept an unaligned (but still
                    # lane-dense) row block; Mosaic pads sublanes.
                    Rb = _largest_divisor_at_most(R, row_cap, 1) or 1
    else:
        # Last dim not 128-friendly: single whole-array block (block == full
        # dims is always legal).  # TODO(synk): rare path, no tiling.
        R, C = 1, total
        Rb, Cb = 1, total

    # FREE metadata reshape to the lane-dense 2-D view.
    x2 = x.reshape(R, C)
    grid = (R // Rb, C // Cb)

    out2 = pl.pallas_call(
        _copy_kernel,
        out_shape=jax.ShapeDtypeStruct((R, C), x.dtype),
        grid=grid,
        in_specs=[pl.BlockSpec((Rb, Cb), lambda i, j: (i, j))],
        out_specs=pl.BlockSpec((Rb, Cb), lambda i, j: (i, j)),
        compiler_params=pltpu.CompilerParams(
            dimension_semantics=("parallel", "parallel"),
            # Worst case: 2x-buffered in + out blocks of <= 8 MiB = 32 MiB;
            # 40 MiB scoped limit leaves headroom and fits v5e/v6e/v7x VMEM.
            vmem_limit_bytes=40 * 1024 * 1024,
        ),
    )(x2)

    # FREE metadata reshape back to the output layout b (o c) h w.
    return out2.reshape(b, o * c, h, w)


if __name__ == "__main__":
    # Small deterministic example consistent with the module:
    # num_objects = 3, batch = 2, channels = 4, spatial = 16x16.
    num_objects = 3
    b, c, h, w = 2, 4, 16, 16

    key = jax.random.PRNGKey(0)
    x = jax.random.normal(key, (b * num_objects, c, h, w), dtype=jnp.float32)

    out = batch_to_shared_objects(x, num_objects)
    out = jax.block_until_ready(out)

    ref = batch_to_shared_objects_reference(x, num_objects)

    assert out.shape == (b, num_objects * c, h, w), out.shape
    assert out.dtype == x.dtype
    assert jnp.array_equal(out, ref), "mismatch vs reference rearrange"

    print("KERNEL_OK")
</pallas_src>

<mosaic_0001>
module attributes {stable_mosaic.version = 11 : i64} {
  func.func @_copy_kernel(%arg0: i32, %arg1: i32, %arg2: memref<1x6144xf32, #tpu.memory_space<vmem>>, %arg3: memref<1x6144xf32, #tpu.memory_space<vmem>>) attributes {dimension_semantics = [#tpu.dimension_semantics<parallel>, #tpu.dimension_semantics<parallel>], iteration_bounds = array<i64: 1, 1>, scalar_prefetch = 0 : i64, scratch_operands = 0 : i64, tpu.core_type = #tpu.core_type<tc>, window_params = [{transform_indices = @transform_0, window_bounds = array<i64: 1, 6144>}, {transform_indices = @transform_1, window_bounds = array<i64: 1, 6144>}]} {
    %c0 = arith.constant 0 : index
    %c0_0 = arith.constant 0 : index
    %0 = vector.load %arg2[%c0, %c0_0] : memref<1x6144xf32, #tpu.memory_space<vmem>>, vector<1x6144xf32>
    %c0_1 = arith.constant 0 : index
    %c0_2 = arith.constant 0 : index
    %1 = vector.load %arg3[%c0_1, %c0_2] : memref<1x6144xf32, #tpu.memory_space<vmem>>, vector<1x6144xf32>
    tpu.vector_store %arg3[%c0_1, %c0_2], %0 {strides = array<i32>} : memref<1x6144xf32, #tpu.memory_space<vmem>>, vector<1x6144xf32>,
    return
  }
  func.func @transform_0(%arg0: i32, %arg1: i32) -> (i32, i32) {
    %c0_i32 = arith.constant 0 : i32
    return %arg0, %arg1 : i32, i32
  }
  func.func @transform_1(%arg0: i32, %arg1: i32) -> (i32, i32) {
    %c0_i32 = arith.constant 0 : i32
    return %arg0, %arg1 : i32, i32
  }
}

</mosaic_0001>

<llo_original>
// kernel: tpu_custom_call.1
$region0: #{tpu_custom_call.1}
  #allocation0 [shape = 'u32[]', space=smem, size = 0x4, offset = 0x4, fixed_abs, tag = 'smem constant byte address 0x4 - core index']
  #allocation1 [shape = 'u32[144,128]{1,0:T(1,128)}', space=vmem, size = 0x12000, scoped, tag = 'internal scratch']
  %s0 = inlined_call_operand.hbm [shape: f32[1,6144], index: 0, kind: input, shape index: {}]
  %s1 = inlined_call_operand.hbm [shape: f32[1,6144], index: 1, kind: output, shape index: {}]
  %s2 = sld [smem:[#allocation0]]
  $region18: #{tpu_custom_call.1} parent=0
    _
  %s4 = ssub.s32 1, %s2
  %s5 = scalar_select 0, %s4, %s2
  $region1: #{tpu_custom_call.1} parent=0
    #allocation2 [shape = 'u8[24576]{0}', space=vmem, size = 0x6000, scoped, tag = 'input window, operand 0, single buffered']
    #allocation3 [shape = 's32[1]{0}', space=sflag, size = 0x4, scoped, tag = 'scoped memory for tpu_custom_call.1']
    #allocation4 [shape = 's32[1]{0}', space=sflag, size = 0x4, scoped, tag = 'scoped memory for tpu_custom_call.1']
    #allocation5 [shape = 'u8[24576]{0}', space=vmem, size = 0x6000, scoped, tag = 'output window, operand 0, single buffered']
    %6 = vsyncpa [#allocation3], 0
    %7 = vsyncpa [#allocation4], 0
    // Predicated region
    $region2: #{tpu_custom_call.1} parent=1 // pred_check
      _
    $region3: #{tpu_custom_call.1} parent=1 // pred_check_branch
      %9 = sbr.rel (0) target = $region5
    $region4: #{tpu_custom_call.1} parent=1 // pred_region
      %s11 = ssub.s32 768, 768
      %12 = vsyncadd [#allocation3], %s11
      %s14 = sshll.u32 [#allocation2], 4
      %s15 = int_to_ptr.vmem [resolvable:$true] %s14
      %17 = dma.hbm_to_vmem [thread:$0]  %s0, 768, %s15, [#allocation3]
    $region5: #{tpu_custom_call.1} parent=1 // pred_fallthru
      _
    // Predicated region
    $region6: #{tpu_custom_call.1} parent=1 // pred_check
      _
    $region7: #{tpu_custom_call.1} parent=1 // pred_check_branch
      %19 = sbr.rel (0) target = $region9
    $region8: #{tpu_custom_call.1} parent=1 // pred_region
      %20 = dma.done [#allocation3], 768
    $region9: #{tpu_custom_call.1} parent=1 // pred_fallthru
      _
    %v21 = vld [vmem:[#allocation2] sm:$0xff]
    %v22 = vld [vmem:[#allocation2 + $0x8] sm:$0xff]
    %v23 = vld [vmem:[#allocation2 + $0x10] sm:$0xff]
    %v24 = vld [vmem:[#allocation2 + $0x18] sm:$0xff]
    %v25 = vld [vmem:[#allocation2 + $0x20] sm:$0xff]
    %v26 = vld [vmem:[#allocation2 + $0x28] sm:$0xff]
    %27 = vst [vmem:[#allocation5] sm:$0xff] %v21
    %28 = vst [vmem:[#allocation5 + $0x8] sm:$0xff] %v22
    %29 = vst [vmem:[#allocation5 + $0x10] sm:$0xff] %v23
    %30 = vst [vmem:[#allocation5 + $0x18] sm:$0xff] %v24
    %31 = vst [vmem:[#allocation5 + $0x20] sm:$0xff] %v25
    %32 = vst [vmem:[#allocation5 + $0x28] sm:$0xff] %v26
    // Predicated region
    $region10: #{tpu_custom_call.1} parent=1 // pred_check
      _
    $region11: #{tpu_custom_call.1} parent=1 // pred_check_branch
      %34 = sbr.rel (0) target = $region13
    $region12: #{tpu_custom_call.1} parent=1 // pred_region
      %s36 = ssub.s32 768, 768
      %37 = vsyncadd [#allocation4], %s36
      %s39 = sshll.u32 [#allocation5], 4
      %s40 = int_to_ptr.vmem [resolvable:$true] %s39
      %42 = dma.vmem_to_hbm [thread:$0]  %s40, 768, %s1, [#allocation4]
    $region13: #{tpu_custom_call.1} parent=1 // pred_fallthru
      _
    // Predicated region
    $region14: #{tpu_custom_call.1} parent=1 // pred_check
      _
    $region15: #{tpu_custom_call.1} parent=1 // pred_check_branch
      %44 = sbr.rel (0) target = $region17
    $region16: #{tpu_custom_call.1} parent=1 // pred_region
      %45 = dma.done [#allocation4], 768
    $region17: #{tpu_custom_call.1} parent=1 // pred_fallthru
      _
    %46 = vsyncpa [#allocation3], 1
    %47 = vsyncpa [#allocation4], 1

</llo_original>
